<compile_context>
chip_gen: v5e
topology: v5e:2x2
jax: 0.10.0
libtpu: 0.0.40
codegen_flags: <defaults>
</compile_context>

<pallas_src>
import functools

import jax
import jax.numpy as jnp
from jax.experimental import pallas as pl
from jax.experimental.pallas import tpu as pltpu


# 3x3 taps in (dy, dx) order; tap index t = (dy+1)*3 + (dx+1).
_TAPS = tuple((dy, dx) for dy in (-1, 0, 1) for dx in (-1, 0, 1))
_CENTER = 4                 # index of the (0, 0) tap
_SLAB = 16                  # padded channel-group height per tap (sublane pack)
_K = 9 * _SLAB              # 144 im2col rows (contraction size of both dots)


# ---------------------------------------------------------------------------
# Kernel
# ---------------------------------------------------------------------------
def make_fused_kernel(img_w):
    """Fused Network kernel for a fixed image width `img_w`."""

    def kernel(fr_ref, mask_ref, w1_ref, w2_ref, o_ref):
        # fr_ref  : (16, L)  f32  -- frame slab: 15 frame channels + ones row
        # mask_ref: (144, L) f32  -- 0/1 boundary mask per im2col row (const)
        # w1_ref  : (16, 144) bf16 -- fused block1 weights (conv+bias+residual
        #                              + mid-frame copy + ones generator)
        # w2_ref  : (8, 144)  bf16 -- block2 weights (rows 3..7 zero padding)
        # o_ref   : (8, L)   f32  -- rows 0..2 = final output channels
        L = fr_ref.shape[-1]
        mask = mask_ref[...]

        def im2col(slab):
            # slab (16, L) f32 -> masked im2col patch (144, L) bf16.
            pieces = []
            for dy, dx in _TAPS:
                shift = (-(dy * img_w + dx)) % L        # out[:, i] = slab[:, i+s]
                pieces.append(slab if shift == 0
                              else pltpu.roll(slab, shift, axis=1))
            # 16-row pieces keep the sublane concat vreg-aligned; one bulk
            # mask multiply + one cast instead of per-tap selects/broadcasts.
            return (jnp.concatenate(pieces, axis=0) * mask).astype(jnp.bfloat16)

        # block1 (all three windows) + bias + residual + block2-slab packing,
        # as ONE MXU contraction.  dt rows: 0..8 data_temp, 9..11 mid frame,
        # 12..14 zero, 15 ones.
        dt = jnp.dot(w1_ref[...], im2col(fr_ref[...]),
                     preferred_element_type=jnp.float32)          # (16, L)

        # block2 (+ bias + mid-frame residual) as one contraction.
        out = jnp.dot(w2_ref[...], im2col(dt),
                      preferred_element_type=jnp.float32)         # (8, L)
        o_ref[...] = out.astype(o_ref.dtype)

    return kernel


# ---------------------------------------------------------------------------
# Host-side parameter / input packing
# ---------------------------------------------------------------------------
def _prep_block1_weights(w1, b1):
    """(3,3,9,3) HWIO conv weights + (3,) bias -> fused (16, 144) bf16 matrix.

    Column layout: col = tap*16 + slab_channel (channels 0..14 = frames,
    15 = constant-1 row).  Row layout of the product (== block2 input slab):
      rows 0..8  : data_temp[3*win + oc] = conv(frames win..win+2) + bias
                   + residual(frame win+1)      (residual folded into the
                   center-tap column -> single bf16 coefficient 1 + w)
      rows 9..11 : copy of the middle frame (block2 residual source)
      rows 12..14: zero
      row  15    : constant 1 (block2 bias source)
    """
    cout = 3
    w_t = jnp.transpose(w1, (3, 0, 1, 2)).reshape(cout, 9, 3 * cout)  # (oc,t,ic)
    rows = jnp.zeros((3, cout, 9, _SLAB), jnp.float32)  # (win, oc, tap, slab_ch)
    for win in range(3):
        rows = rows.at[win, :, :, 3 * win:3 * win + 9].set(w_t)
    rows = rows.reshape(9, _K)
    center = _CENTER * _SLAB
    r = jnp.arange(9)
    rows = rows.at[:, center + _SLAB - 1].add(jnp.tile(b1, 3))   # bias via ones row
    rows = rows.at[r, center + 3 + r].add(1.0)                   # residual frame w+1

    mid = jnp.zeros((3, _K), jnp.float32)
    mid = mid.at[jnp.arange(3), center + 6 + jnp.arange(3)].set(1.0)  # mid frame copy
    zero = jnp.zeros((3, _K), jnp.float32)
    ones_row = jnp.zeros((1, _K), jnp.float32).at[0, center + _SLAB - 1].set(1.0)
    return jnp.concatenate([rows, mid, zero, ones_row], axis=0).astype(jnp.bfloat16)


def _prep_block2_weights(w2, b2):
    """(3,3,9,3) HWIO weights + (3,) bias -> (8, 144) bf16 (rows 3..7 padding)."""
    cout = 3
    w_t = jnp.transpose(w2, (3, 0, 1, 2)).reshape(cout, 9, 3 * cout)  # (oc,t,ic)
    rows = jnp.zeros((cout, 9, _SLAB), jnp.float32).at[:, :, 0:9].set(w_t)
    rows = rows.reshape(cout, _K)
    center = _CENTER * _SLAB
    rows = rows.at[:, center + _SLAB - 1].add(b2)                         # bias
    rows = rows.at[jnp.arange(3), center + 9 + jnp.arange(3)].add(1.0)    # residual
    pad = jnp.zeros((8 - cout, _K), jnp.float32)
    return jnp.concatenate([rows, pad], axis=0).astype(jnp.bfloat16)


def _prep_masks(h, w, bt):
    """0/1 boundary masks for the zero-padded 3x3 conv: (144, bt*h*w) f32."""
    hw = h * w
    idx = jnp.arange(hw, dtype=jnp.int32)
    row, col = idx // w, idx % w
    ms = []
    for dy, dx in _TAPS:
        ms.append((row + dy >= 0) & (row + dy < h)
                  & (col + dx >= 0) & (col + dx < w))
    m = jnp.stack(ms, axis=0).astype(jnp.float32)   # (9, hw)
    m = jnp.repeat(m, _SLAB, axis=0)                # (144, hw) -- one row / patch row
    return jnp.tile(m, (1, bt))                     # images are hw-contiguous in lanes


def _prep_frames(frames):
    """(b,N,c,h,w) -> (16, b*h*w) f32 slab; row 15 is the constant-1 bias row."""
    b, N, c, h, w = frames.shape
    fr = jnp.transpose(frames, (1, 2, 0, 3, 4)).reshape(N * c, b * h * w)
    ones = jnp.ones((1, b * h * w), frames.dtype)
    return jnp.concatenate([fr, ones], axis=0)


def _pick_batch_tile(b, hw, target_lanes=2048):
    """Largest divisor of b with roughly >= target_lanes lanes per grid step.

    (On v7x, pass batch_tile explicitly if you want an even grid length >= 2
    so both TensorCores get equal work.)
    """
    bt = max(1, min(b, (target_lanes + hw - 1) // hw))
    while b % bt:
        bt -= 1
    return bt


def network_forward(frames, params, in_frames=5, batch_tile=None):
    """frames: (b, N, c, h, w) float32 (PyTorch layout).  Returns (b, c, h, w)."""
    b, N, c, h, w = frames.shape
    assert N == in_frames == 5 and c == 3, "Network hard-codes 5 frames x 3 ch"
    hw = h * w
    bt = batch_tile if batch_tile is not None else _pick_batch_tile(b, hw)
    L = bt * hw
    assert L % 128 == 0 and b % bt == 0

    fr = _prep_frames(frames)                                   # (16, b*hw) f32
    mask = _prep_masks(h, w, bt)                                # (144, L)   f32
    w1_big = _prep_block1_weights(params["w1"], params["b1"])   # (16, 144)  bf16
    w2_big = _prep_block2_weights(params["w2"], params["b2"])   # (8, 144)   bf16

    out = pl.pallas_call(
        make_fused_kernel(w),
        out_shape=jax.ShapeDtypeStruct((8, b * hw), jnp.float32),
        grid=(b // bt,),
        in_specs=[
            pl.BlockSpec((16, L), lambda i: (0, i)),     # frame slab (per tile)
            pl.BlockSpec((_K, L), lambda i: (0, 0)),     # masks (resident)
            pl.BlockSpec((16, _K), lambda i: (0, 0)),    # block1 weights
            pl.BlockSpec((8, _K), lambda i: (0, 0)),     # block2 weights
        ],
        out_specs=pl.BlockSpec((8, L), lambda i: (0, i)),
        compiler_params=pltpu.CompilerParams(
            dimension_semantics=("parallel",)),
    )(fr, mask, w1_big, w2_big)

    # (8, b*hw) -> (b, 8, h, w) -> keep the 3 real channels.
    return out.reshape(8, b, h, w).transpose(1, 0, 2, 3)[:, :c]


def init_params(key, channel=3):
    """Deterministic synthetic parameters (shapes implied by Network.__init__)."""
    in1 = 3 * channel  # 9
    k1, k2 = jax.random.split(key)
    return {
        # block1 / block2: MU_block(9, 3) -> 3x3 conv (HWIO) + bias
        "w1": 0.1 * jax.random.normal(k1, (3, 3, in1, channel), jnp.float32),
        "b1": 0.10 + 0.05 * jnp.arange(channel, dtype=jnp.float32),
        "w2": 0.1 * jax.random.normal(k2, (3, 3, in1, channel), jnp.float32),
        "b2": -0.20 + 0.10 * jnp.arange(channel, dtype=jnp.float32),
    }


# ---------------------------------------------------------------------------
# Pure-JAX reference of the same synthesized MU_block (validation only).
# ---------------------------------------------------------------------------
def _mu_block_ref(x_nhwc, ref_nhwc, w, b):
    B, H, W, _ = x_nhwc.shape
    xb = x_nhwc.astype(jnp.bfloat16).astype(jnp.float32)
    rb = ref_nhwc.astype(jnp.bfloat16).astype(jnp.float32)
    wb = w.astype(jnp.bfloat16).astype(jnp.float32)
    xp = jnp.pad(xb, ((0, 0), (1, 1), (1, 1), (0, 0)))
    acc = jnp.zeros(ref_nhwc.shape, jnp.float32)
    for dy in range(3):
        for dx in range(3):
            acc = acc + jnp.einsum("bhwi,io->bhwo",
                                   xp[:, dy:dy + H, dx:dx + W, :], wb[dy, dx],
                                   preferred_element_type=jnp.float32)
    return acc + b + rb


def network_ref(frames, params):
    b, N, c, h, w = frames.shape
    fr = jnp.transpose(frames, (0, 1, 3, 4, 2))      # NHWC per frame
    outs = []
    for i in range(N - 2):
        x9 = jnp.concatenate([fr[:, i], fr[:, i + 1], fr[:, i + 2]], axis=-1)
        outs.append(_mu_block_ref(x9, fr[:, i + 1], params["w1"], params["b1"]))
    data_temp = jnp.concatenate(outs, axis=-1)
    out = _mu_block_ref(data_temp, fr[:, N // 2], params["w2"], params["b2"])
    return jnp.transpose(out, (0, 3, 1, 2))


if __name__ == "__main__":
    key = jax.random.PRNGKey(0)
    k_in, k_p = jax.random.split(key)

    b, N, c, h, w = 2, 5, 3, 16, 16   # small shapes consistent with in_frames=5
    frames = jax.random.normal(k_in, (b, N, c, h, w), dtype=jnp.float32)
    params = init_params(k_p, channel=c)

    fwd = jax.jit(functools.partial(network_forward, in_frames=N))
    out = fwd(frames, params)
    jax.block_until_ready(out)
    assert out.shape == (b, c, h, w)

    ref = network_ref(frames, params)
    err = float(jnp.max(jnp.abs(out - ref)))
    # Both paths use bf16 matmul operands with f32 accumulation; the kernel
    # additionally folds the block1 residual into one bf16 weight (1 + w),
    # worth <~1e-2 at the output.  4e-2 still flags any structural bug
    # (wrong tap/roll sign, mask, layout, missing bias/residual) by >2.5x.
    assert err < 4e-2, f"mismatch vs pure-JAX reference: max|diff|={err}"
    print("KERNEL_OK")
</pallas_src>

<mosaic_0001>
module attributes {stable_mosaic.version = 11 : i64} {
  func.func @kernel(%arg0: i32, %arg1: memref<16x512xf32, #tpu.memory_space<vmem>>, %arg2: memref<144x512xf32, #tpu.memory_space<vmem>>, %arg3: memref<16x144xbf16, #tpu.memory_space<vmem>>, %arg4: memref<8x144xbf16, #tpu.memory_space<vmem>>, %arg5: memref<8x512xf32, #tpu.memory_space<vmem>>) attributes {dimension_semantics = [#tpu.dimension_semantics<parallel>], iteration_bounds = array<i64: 1>, scalar_prefetch = 0 : i64, scratch_operands = 0 : i64, tpu.core_type = #tpu.core_type<tc>, window_params = [{transform_indices = @transform_0, window_bounds = array<i64: 16, 512>}, {pipeline_mode = #tpu.pipeline_mode<synchronous>, transform_indices = @transform_1, window_bounds = array<i64: 144, 512>}, {pipeline_mode = #tpu.pipeline_mode<synchronous>, transform_indices = @transform_2, window_bounds = array<i64: 16, 144>}, {pipeline_mode = #tpu.pipeline_mode<synchronous>, transform_indices = @transform_3, window_bounds = array<i64: 8, 144>}, {transform_indices = @transform_4, window_bounds = array<i64: 8, 512>}]} {
    %c0 = arith.constant 0 : index
    %c0_0 = arith.constant 0 : index
    %0 = vector.load %arg2[%c0, %c0_0] : memref<144x512xf32, #tpu.memory_space<vmem>>, vector<144x512xf32>
    %c0_1 = arith.constant 0 : index
    %c0_2 = arith.constant 0 : index
    %1 = vector.load %arg3[%c0_1, %c0_2] : memref<16x144xbf16, #tpu.memory_space<vmem>>, vector<16x144xbf16>
    %c0_3 = arith.constant 0 : index
    %c0_4 = arith.constant 0 : index
    %2 = vector.load %arg1[%c0_3, %c0_4] : memref<16x512xf32, #tpu.memory_space<vmem>>, vector<16x512xf32>
    %c17_i32 = arith.constant 17 : i32
    %3 = tpu.dynamic_rotate %2 by %c17_i32 dim 1 : vector<16x512xf32>, i32 -> vector<16x512xf32>
    %c16_i32 = arith.constant 16 : i32
    %4 = tpu.dynamic_rotate %2 by %c16_i32 dim 1 : vector<16x512xf32>, i32 -> vector<16x512xf32>
    %c15_i32 = arith.constant 15 : i32
    %5 = tpu.dynamic_rotate %2 by %c15_i32 dim 1 : vector<16x512xf32>, i32 -> vector<16x512xf32>
    %c1_i32 = arith.constant 1 : i32
    %6 = tpu.dynamic_rotate %2 by %c1_i32 dim 1 : vector<16x512xf32>, i32 -> vector<16x512xf32>
    %c511_i32 = arith.constant 511 : i32
    %7 = tpu.dynamic_rotate %2 by %c511_i32 dim 1 : vector<16x512xf32>, i32 -> vector<16x512xf32>
    %c497_i32 = arith.constant 497 : i32
    %8 = tpu.dynamic_rotate %2 by %c497_i32 dim 1 : vector<16x512xf32>, i32 -> vector<16x512xf32>
    %c496_i32 = arith.constant 496 : i32
    %9 = tpu.dynamic_rotate %2 by %c496_i32 dim 1 : vector<16x512xf32>, i32 -> vector<16x512xf32>
    %c495_i32 = arith.constant 495 : i32
    %10 = tpu.dynamic_rotate %2 by %c495_i32 dim 1 : vector<16x512xf32>, i32 -> vector<16x512xf32>
    %11 = tpu.concatenate %3, %4, %5, %6, %2, %7, %8, %9, %10 in 0 : vector<16x512xf32>, vector<16x512xf32>, vector<16x512xf32>, vector<16x512xf32>, vector<16x512xf32>, vector<16x512xf32>, vector<16x512xf32>, vector<16x512xf32>, vector<16x512xf32> -> vector<144x512xf32>
    %12 = arith.mulf %11, %0 : vector<144x512xf32>
    %13 = arith.truncf %12 : vector<144x512xf32> to vector<144x512xbf16>
    %cst = arith.constant dense<0.000000e+00> : vector<16x512xf32>
    %14 = tpu.matmul %1, %13, %cst {dimension_numbers = #tpu.dot_dimension_numbers<[1], [0], [0], [1], [0, 0, 1, 1], [], []>} : vector<16x144xbf16>, vector<144x512xbf16>, vector<16x512xf32> -> vector<16x512xf32>
    %c0_5 = arith.constant 0 : index
    %c0_6 = arith.constant 0 : index
    %15 = vector.load %arg4[%c0_5, %c0_6] : memref<8x144xbf16, #tpu.memory_space<vmem>>, vector<8x144xbf16>
    %c17_i32_7 = arith.constant 17 : i32
    %16 = tpu.dynamic_rotate %14 by %c17_i32_7 dim 1 : vector<16x512xf32>, i32 -> vector<16x512xf32>
    %c16_i32_8 = arith.constant 16 : i32
    %17 = tpu.dynamic_rotate %14 by %c16_i32_8 dim 1 : vector<16x512xf32>, i32 -> vector<16x512xf32>
    %c15_i32_9 = arith.constant 15 : i32
    %18 = tpu.dynamic_rotate %14 by %c15_i32_9 dim 1 : vector<16x512xf32>, i32 -> vector<16x512xf32>
    %c1_i32_10 = arith.constant 1 : i32
    %19 = tpu.dynamic_rotate %14 by %c1_i32_10 dim 1 : vector<16x512xf32>, i32 -> vector<16x512xf32>
    %c511_i32_11 = arith.constant 511 : i32
    %20 = tpu.dynamic_rotate %14 by %c511_i32_11 dim 1 : vector<16x512xf32>, i32 -> vector<16x512xf32>
    %c497_i32_12 = arith.constant 497 : i32
    %21 = tpu.dynamic_rotate %14 by %c497_i32_12 dim 1 : vector<16x512xf32>, i32 -> vector<16x512xf32>
    %c496_i32_13 = arith.constant 496 : i32
    %22 = tpu.dynamic_rotate %14 by %c496_i32_13 dim 1 : vector<16x512xf32>, i32 -> vector<16x512xf32>
    %c495_i32_14 = arith.constant 495 : i32
    %23 = tpu.dynamic_rotate %14 by %c495_i32_14 dim 1 : vector<16x512xf32>, i32 -> vector<16x512xf32>
    %24 = tpu.concatenate %16, %17, %18, %19, %14, %20, %21, %22, %23 in 0 : vector<16x512xf32>, vector<16x512xf32>, vector<16x512xf32>, vector<16x512xf32>, vector<16x512xf32>, vector<16x512xf32>, vector<16x512xf32>, vector<16x512xf32>, vector<16x512xf32> -> vector<144x512xf32>
    %25 = arith.mulf %24, %0 : vector<144x512xf32>
    %26 = arith.truncf %25 : vector<144x512xf32> to vector<144x512xbf16>
    %cst_15 = arith.constant dense<0.000000e+00> : vector<8x512xf32>
    %27 = tpu.matmul %15, %26, %cst_15 {dimension_numbers = #tpu.dot_dimension_numbers<[1], [0], [0], [1], [0, 0, 1, 1], [], []>} : vector<8x144xbf16>, vector<144x512xbf16>, vector<8x512xf32> -> vector<8x512xf32>
    %c0_16 = arith.constant 0 : index
    %c0_17 = arith.constant 0 : index
    %28 = vector.load %arg5[%c0_16, %c0_17] : memref<8x512xf32, #tpu.memory_space<vmem>>, vector<8x512xf32>
    tpu.vector_store %arg5[%c0_16, %c0_17], %27 {strides = array<i32>} : memref<8x512xf32, #tpu.memory_space<vmem>>, vector<8x512xf32>,
    return
  }
  func.func @transform_0(%arg0: i32) -> (i32, i32) {
    %c0_i32 = arith.constant 0 : i32
    %c0_i32_0 = arith.constant 0 : i32
    return %c0_i32, %arg0 : i32, i32
  }
  func.func @transform_1(%arg0: i32) -> (i32, i32) {
    %c0_i32 = arith.constant 0 : i32
    %c0_i32_0 = arith.constant 0 : i32
    %c0_i32_1 = arith.constant 0 : i32
    return %c0_i32, %c0_i32_0 : i32, i32
  }
  func.func @transform_2(%arg0: i32) -> (i32, i32) {
    %c0_i32 = arith.constant 0 : i32
    %c0_i32_0 = arith.constant 0 : i32
    %c0_i32_1 = arith.constant 0 : i32
    return %c0_i32, %c0_i32_0 : i32, i32
  }
  func.func @transform_3(%arg0: i32) -> (i32, i32) {
    %c0_i32 = arith.constant 0 : i32
    %c0_i32_0 = arith.constant 0 : i32
    %c0_i32_1 = arith.constant 0 : i32
    return %c0_i32, %c0_i32_0 : i32, i32
  }
  func.func @transform_4(%arg0: i32) -> (i32, i32) {
    %c0_i32 = arith.constant 0 : i32
    %c0_i32_0 = arith.constant 0 : i32
    return %c0_i32, %arg0 : i32, i32
  }
}

</mosaic_0001>

<llo_original>
// kernel: tile.16
$region0: #{tile.16}
  #allocation0 [shape = 's32[1]{0}', space=sflag, size = 0x4, scoped, tag = 'scoped memory for tile.16']
  %s0 = inlined_call_operand.vmem [shape: f32[3], index: 0, kind: input, shape index: {}]
  %s1 = inlined_call_operand.vmem [shape: f32[3,3], index: 1, kind: output, shape index: {}]
  // Predicated region
  $region2: #{tile.16} parent=0 // pred_check
    _
  $region3: #{tile.16} parent=0 // pred_check_branch
    %3 = sbr.rel (0) target = $region5
  $region4: #{tile.16} parent=0 // pred_region
    _
  $region5: #{tile.16} parent=0 // pred_fallthru
    _
  %v4 = vld [vmem:[%s0] ss:$0 sm:$0xff]
  %5 = vst [vmem:[%s1] sm:$0xf] %v4

// kernel: network_forward.1
$region0: #{network_forward.1}
  #allocation0 [shape = 'u32[]', space=smem, size = 0x4, offset = 0x4, fixed_abs, tag = 'smem constant byte address 0x4 - core index']
  #allocation1 [shape = 'u32[72,128]{1,0:T(1,128)}', space=vmem, size = 0x9000, scoped, tag = 'internal scratch']
  %s0 = inlined_call_operand.vmem [shape: f32[16,512], index: 0, kind: input, shape index: {}]
  %s1 = inlined_call_operand.vmem [shape: f32[144,512], index: 1, kind: input, shape index: {}]
  %s2 = inlined_call_operand.vmem [shape: bf16[16,144], index: 2, kind: input, shape index: {}]
  %s3 = inlined_call_operand.vmem [shape: bf16[8,144], index: 3, kind: input, shape index: {}]
  %s4 = inlined_call_operand.vmem [shape: f32[8,512], index: 4, kind: output, shape index: {}]
  %s5 = sld [smem:[#allocation0]]
  $region26: #{network_forward.1} parent=0
    _
  %s7 = ssub.s32 1, %s5
  %s8 = scalar_select 0, %s7, %s5
  // Predicated region
  $region2: #{network_forward.1} parent=0 // pred_check
    _
  $region3: #{network_forward.1} parent=0 // pred_check_branch
    %10 = sbr.rel (0) target = $region5
  $region4: #{network_forward.1} parent=0 // pred_region
    _
  $region5: #{network_forward.1} parent=0 // pred_fallthru
    _
  // Predicated region
  $region6: #{network_forward.1} parent=0 // pred_check
    _
  $region7: #{network_forward.1} parent=0 // pred_check_branch
    %12 = sbr.rel (0) target = $region9
  $region8: #{network_forward.1} parent=0 // pred_region
    _
  $region9: #{network_forward.1} parent=0 // pred_fallthru
    _
  // Predicated region
  $region10: #{network_forward.1} parent=0 // pred_check
    _
  $region11: #{network_forward.1} parent=0 // pred_check_branch
    %14 = sbr.rel (0) target = $region13
  $region12: #{network_forward.1} parent=0 // pred_region
    _
  $region13: #{network_forward.1} parent=0 // pred_fallthru
    _
  // Predicated region
  $region14: #{network_forward.1} parent=0 // pred_check
    _
  $region15: #{network_forward.1} parent=0 // pred_check_branch
    %16 = sbr.rel (0) target = $region17
  $region16: #{network_forward.1} parent=0 // pred_region
    _
  $region17: #{network_forward.1} parent=0 // pred_fallthru
    _
  %v18 = vld [vmem:[%s1] sm:$0xff]
  %v19 = vld [vmem:[%s1 + $0x8] sm:$0xff]
  %v20 = vld [vmem:[%s1 + $0x10] sm:$0xff]
  %v21 = vld [vmem:[%s1 + $0x18] sm:$0xff]
  %v22 = vld [vmem:[%s1 + $0x20] sm:$0xff]
  %v23 = vld [vmem:[%s1 + $0x28] sm:$0xff]
  %v24 = vld [vmem:[%s1 + $0x30] sm:$0xff]
  %v25 = vld [vmem:[%s1 + $0x38] sm:$0xff]
  %v26 = vld [vmem:[%s1 + $0x40] sm:$0xff]
  %v27 = vld [vmem:[%s1 + $0x48] sm:$0xff]
  %v28 = vld [vmem:[%s1 + $0x50] sm:$0xff]
  %v29 = vld [vmem:[%s1 + $0x58] sm:$0xff]
  %v30 = vld [vmem:[%s1 + $0x60] sm:$0xff]
  %v31 = vld [vmem:[%s1 + $0x68] sm:$0xff]
  %v32 = vld [vmem:[%s1 + $0x70] sm:$0xff]
  %v33 = vld [vmem:[%s1 + $0x78] sm:$0xff]
  %v34 = vld [vmem:[%s1 + $0x80] sm:$0xff]
  %v35 = vld [vmem:[%s1 + $0x88] sm:$0xff]
  %v36 = vld [vmem:[%s1 + $0x90] sm:$0xff]
  %v37 = vld [vmem:[%s1 + $0x98] sm:$0xff]
  %v38 = vld [vmem:[%s1 + $0xa0] sm:$0xff]
  %v39 = vld [vmem:[%s1 + $0xa8] sm:$0xff]
  %v40 = vld [vmem:[%s1 + $0xb0] sm:$0xff]
  %v41 = vld [vmem:[%s1 + $0xb8] sm:$0xff]
  %v42 = vld [vmem:[%s1 + $0xc0] sm:$0xff]
  %v43 = vld [vmem:[%s1 + $0xc8] sm:$0xff]
  %v44 = vld [vmem:[%s1 + $0xd0] sm:$0xff]
  %v45 = vld [vmem:[%s1 + $0xd8] sm:$0xff]
  %v46 = vld [vmem:[%s1 + $0xe0] sm:$0xff]
  %v47 = vld [vmem:[%s1 + $0xe8] sm:$0xff]
  %v48 = vld [vmem:[%s1 + $0xf0] sm:$0xff]
  %v49 = vld [vmem:[%s1 + $0xf8] sm:$0xff]
  %v50 = vld [vmem:[%s1 + $0x100] sm:$0xff]
  %v51 = vld [vmem:[%s1 + $0x108] sm:$0xff]
  %v52 = vld [vmem:[%s1 + $0x110] sm:$0xff]
  %v53 = vld [vmem:[%s1 + $0x118] sm:$0xff]
  %v54 = vld [vmem:[%s1 + $0x120] sm:$0xff]
  %v55 = vld [vmem:[%s1 + $0x128] sm:$0xff]
  %v56 = vld [vmem:[%s1 + $0x130] sm:$0xff]
  %v57 = vld [vmem:[%s1 + $0x138] sm:$0xff]
  %v58 = vld [vmem:[%s1 + $0x140] sm:$0xff]
  %v59 = vld [vmem:[%s1 + $0x148] sm:$0xff]
  %v60 = vld [vmem:[%s1 + $0x150] sm:$0xff]
  %v61 = vld [vmem:[%s1 + $0x158] sm:$0xff]
  %v62 = vld [vmem:[%s1 + $0x160] sm:$0xff]
  %v63 = vld [vmem:[%s1 + $0x168] sm:$0xff]
  %v64 = vld [vmem:[%s1 + $0x170] sm:$0xff]
  %v65 = vld [vmem:[%s1 + $0x178] sm:$0xff]
  %v66 = vld [vmem:[%s1 + $0x180] sm:$0xff]
  %v67 = vld [vmem:[%s1 + $0x188] sm:$0xff]
  %v68 = vld [vmem:[%s1 + $0x190] sm:$0xff]
  %v69 = vld [vmem:[%s1 + $0x198] sm:$0xff]
  %v70 = vld [vmem:[%s1 + $0x1a0] sm:$0xff]
  %v71 = vld [vmem:[%s1 + $0x1a8] sm:$0xff]
  %v72 = vld [vmem:[%s1 + $0x1b0] sm:$0xff]
  %v73 = vld [vmem:[%s1 + $0x1b8] sm:$0xff]
  %v74 = vld [vmem:[%s1 + $0x1c0] sm:$0xff]
  %v75 = vld [vmem:[%s1 + $0x1c8] sm:$0xff]
  %v76 = vld [vmem:[%s1 + $0x1d0] sm:$0xff]
  %v77 = vld [vmem:[%s1 + $0x1d8] sm:$0xff]
  %v78 = vld [vmem:[%s1 + $0x1e0] sm:$0xff]
  %v79 = vld [vmem:[%s1 + $0x1e8] sm:$0xff]
  %v80 = vld [vmem:[%s1 + $0x1f0] sm:$0xff]
  %v81 = vld [vmem:[%s1 + $0x1f8] sm:$0xff]
  %v82 = vld [vmem:[%s1 + $0x200] sm:$0xff]
  %v83 = vld [vmem:[%s1 + $0x208] sm:$0xff]
  %v84 = vld [vmem:[%s1 + $0x210] sm:$0xff]
  %v85 = vld [vmem:[%s1 + $0x218] sm:$0xff]
  %v86 = vld [vmem:[%s1 + $0x220] sm:$0xff]
  %v87 = vld [vmem:[%s1 + $0x228] sm:$0xff]
  %v88 = vld [vmem:[%s1 + $0x230] sm:$0xff]
  %v89 = vld [vmem:[%s1 + $0x238] sm:$0xff]
  %v90 = vld [vmem:[%s2] sm:$0xff]
  %v91 = vld [vmem:[%s2 + $0x8] sm:$0xff]
  %v92 = vld [vmem:[%s0] sm:$0xff]
  %v93 = vld [vmem:[%s0 + $0x8] sm:$0xff]
  %v94 = vld [vmem:[%s0 + $0x10] sm:$0xff]
  %v95 = vld [vmem:[%s0 + $0x18] sm:$0xff]
  %v96 = vld [vmem:[%s0 + $0x20] sm:$0xff]
  %v97 = vld [vmem:[%s0 + $0x28] sm:$0xff]
  %v98 = vld [vmem:[%s0 + $0x30] sm:$0xff]
  %v99 = vld [vmem:[%s0 + $0x38] sm:$0xff]
  %100 = vrot.lane.b32.xlu0 %v92, 17
  %v101 = vpop.permute.xlu0 %100
  %102 = vrot.lane.b32.xlu0 %v96, 17
  %v103 = vpop.permute.xlu0 %102
  %104 = vrot.lane.b32.xlu0 %v93, 17
  %v105 = vpop.permute.xlu0 %104
  %106 = vrot.lane.b32.xlu0 %v97, 17
  %v107 = vpop.permute.xlu0 %106
  %108 = vrot.lane.b32.xlu0 %v94, 17
  %v109 = vpop.permute.xlu0 %108
  %110 = vrot.lane.b32.xlu0 %v98, 17
  %v111 = vpop.permute.xlu0 %110
  %112 = vrot.lane.b32.xlu0 %v95, 17
  %v113 = vpop.permute.xlu0 %112
  %114 = vrot.lane.b32.xlu0 %v99, 17
  %v115 = vpop.permute.xlu0 %114
  %v116 = vlaneseq
  %v117 = vand.u32 %v116, 127
  %vm118 = vcmp.lt.s32.totalorder %v117, 17
  %v119 = vsel %vm118, %v109, %v113
  %v120 = vsel %vm118, %v111, %v115
  %v121 = vsel %vm118, %v105, %v109
  %v122 = vsel %vm118, %v107, %v111
  %v123 = vsel %vm118, %v101, %v105
  %v124 = vsel %vm118, %v103, %v107
  %v125 = vsel %vm118, %v113, %v101
  %v126 = vsel %vm118, %v115, %v103
  %127 = vrot.lane.b32.xlu0 %v92, 16
  %v128 = vpop.permute.xlu0 %127
  %129 = vrot.lane.b32.xlu0 %v96, 16
  %v130 = vpop.permute.xlu0 %129
  %131 = vrot.lane.b32.xlu0 %v93, 16
  %v132 = vpop.permute.xlu0 %131
  %133 = vrot.lane.b32.xlu0 %v97, 16
  %v134 = vpop.permute.xlu0 %133
  %135 = vrot.lane.b32.xlu0 %v94, 16
  %v136 = vpop.permute.xlu0 %135
  %137 = vrot.lane.b32.xlu0 %v98, 16
  %v138 = vpop.permute.xlu0 %137
  %139 = vrot.lane.b32.xlu0 %v95, 16
  %v140 = vpop.permute.xlu0 %139
  %141 = vrot.lane.b32.xlu0 %v99, 16
  %v142 = vpop.permute.xlu0 %141
  %vm143 = vcmp.lt.s32.totalorder %v117, 16
  %v144 = vsel %vm143, %v136, %v140
  %v145 = vsel %vm143, %v138, %v142
  %v146 = vsel %vm143, %v132, %v136
  %v147 = vsel %vm143, %v134, %v138
  %v148 = vsel %vm143, %v128, %v132
  %v149 = vsel %vm143, %v130, %v134
  %v150 = vsel %vm143, %v140, %v128
  %v151 = vsel %vm143, %v142, %v130
  %152 = vrot.lane.b32.xlu0 %v92, 15
  %v153 = vpop.permute.xlu0 %152
  %154 = vrot.lane.b32.xlu0 %v96, 15
  %v155 = vpop.permute.xlu0 %154
  %156 = vrot.lane.b32.xlu0 %v93, 15
  %v157 = vpop.permute.xlu0 %156
  %158 = vrot.lane.b32.xlu0 %v97, 15
  %v159 = vpop.permute.xlu0 %158
  %160 = vrot.lane.b32.xlu0 %v94, 15
  %v161 = vpop.permute.xlu0 %160
  %162 = vrot.lane.b32.xlu0 %v98, 15
  %v163 = vpop.permute.xlu0 %162
  %164 = vrot.lane.b32.xlu0 %v95, 15
  %v165 = vpop.permute.xlu0 %164
  %166 = vrot.lane.b32.xlu0 %v99, 15
  %v167 = vpop.permute.xlu0 %166
  %vm168 = vcmp.lt.s32.totalorder %v117, 15
  %v169 = vsel %vm168, %v161, %v165
  %v170 = vsel %vm168, %v163, %v167
  %v171 = vsel %vm168, %v157, %v161
  %v172 = vsel %vm168, %v159, %v163
  %v173 = vsel %vm168, %v153, %v157
  %v174 = vsel %vm168, %v155, %v159
  %v175 = vsel %vm168, %v165, %v153
  %v176 = vsel %vm168, %v167, %v155
  %177 = vrot.lane.b32.xlu0 %v92, 1
  %v178 = vpop.permute.xlu0 %177
  %179 = vrot.lane.b32.xlu0 %v96, 1
  %v180 = vpop.permute.xlu0 %179
  %181 = vrot.lane.b32.xlu0 %v93, 1
  %v182 = vpop.permute.xlu0 %181
  %183 = vrot.lane.b32.xlu0 %v97, 1
  %v184 = vpop.permute.xlu0 %183
  %185 = vrot.lane.b32.xlu0 %v94, 1
  %v186 = vpop.permute.xlu0 %185
  %187 = vrot.lane.b32.xlu0 %v98, 1
  %v188 = vpop.permute.xlu0 %187
  %189 = vrot.lane.b32.xlu0 %v95, 1
  %v190 = vpop.permute.xlu0 %189
  %191 = vrot.lane.b32.xlu0 %v99, 1
  %v192 = vpop.permute.xlu0 %191
  %vm193 = vcmp.lt.s32.totalorder %v117, 1
  %v194 = vsel %vm193, %v186, %v190
  %v195 = vsel %vm193, %v188, %v192
  %v196 = vsel %vm193, %v182, %v186
  %v197 = vsel %vm193, %v184, %v188
  %v198 = vsel %vm193, %v178, %v182
  %v199 = vsel %vm193, %v180, %v184
  %v200 = vsel %vm193, %v190, %v178
  %v201 = vsel %vm193, %v192, %v180
  %202 = vrot.lane.b32.xlu0 %v92, 127
  %v203 = vpop.permute.xlu0 %202
  %204 = vrot.lane.b32.xlu0 %v96, 127
  %v205 = vpop.permute.xlu0 %204
  %206 = vrot.lane.b32.xlu0 %v93, 127
  %v207 = vpop.permute.xlu0 %206
  %208 = vrot.lane.b32.xlu0 %v97, 127
  %v209 = vpop.permute.xlu0 %208
  %210 = vrot.lane.b32.xlu0 %v94, 127
  %v211 = vpop.permute.xlu0 %210
  %212 = vrot.lane.b32.xlu0 %v98, 127
  %v213 = vpop.permute.xlu0 %212
  %214 = vrot.lane.b32.xlu0 %v95, 127
  %v215 = vpop.permute.xlu0 %214
  %216 = vrot.lane.b32.xlu0 %v99, 127
  %v217 = vpop.permute.xlu0 %216
  %vm218 = vcmp.lt.s32.totalorder %v117, 127
  %v219 = vsel %vm218, %v211, %v215
  %v220 = vsel %vm218, %v213, %v217
  %v221 = vsel %vm218, %v207, %v211
  %v222 = vsel %vm218, %v209, %v213
  %v223 = vsel %vm218, %v203, %v207
  %v224 = vsel %vm218, %v205, %v209
  %v225 = vsel %vm218, %v215, %v203
  %v226 = vsel %vm218, %v217, %v205
  %227 = vrot.lane.b32.xlu0 %v92, 113
  %v228 = vpop.permute.xlu0 %227
  %229 = vrot.lane.b32.xlu0 %v96, 113
  %v230 = vpop.permute.xlu0 %229
  %231 = vrot.lane.b32.xlu0 %v93, 113
  %v232 = vpop.permute.xlu0 %231
  %233 = vrot.lane.b32.xlu0 %v97, 113
  %v234 = vpop.permute.xlu0 %233
  %235 = vrot.lane.b32.xlu0 %v94, 113
  %v236 = vpop.permute.xlu0 %235
  %237 = vrot.lane.b32.xlu0 %v98, 113
  %v238 = vpop.permute.xlu0 %237
  %239 = vrot.lane.b32.xlu0 %v95, 113
  %v240 = vpop.permute.xlu0 %239
  %241 = vrot.lane.b32.xlu0 %v99, 113
  %v242 = vpop.permute.xlu0 %241
  %vm243 = vcmp.lt.s32.totalorder %v117, 113
  %v244 = vsel %vm243, %v236, %v240
  %v245 = vsel %vm243, %v238, %v242
  %v246 = vsel %vm243, %v232, %v236
  %v247 = vsel %vm243, %v234, %v238
  %v248 = vsel %vm243, %v228, %v232
  %v249 = vsel %vm243, %v230, %v234
  %v250 = vsel %vm243, %v240, %v228
  %v251 = vsel %vm243, %v242, %v230
  %252 = vrot.lane.b32.xlu0 %v92, 112
  %v253 = vpop.permute.xlu0 %252
  %254 = vrot.lane.b32.xlu0 %v96, 112
  %v255 = vpop.permute.xlu0 %254
  %256 = vrot.lane.b32.xlu0 %v93, 112
  %v257 = vpop.permute.xlu0 %256
  %258 = vrot.lane.b32.xlu0 %v97, 112
  %v259 = vpop.permute.xlu0 %258
  %260 = vrot.lane.b32.xlu0 %v94, 112
  %v261 = vpop.permute.xlu0 %260
  %262 = vrot.lane.b32.xlu0 %v98, 112
  %v263 = vpop.permute.xlu0 %262
  %264 = vrot.lane.b32.xlu0 %v95, 112
  %v265 = vpop.permute.xlu0 %264
  %266 = vrot.lane.b32.xlu0 %v99, 112
  %v267 = vpop.permute.xlu0 %266
  %vm268 = vcmp.lt.s32.totalorder %v117, 112
  %v269 = vsel %vm268, %v261, %v265
  %v270 = vsel %vm268, %v263, %v267
  %v271 = vsel %vm268, %v257, %v261
  %v272 = vsel %vm268, %v259, %v263
  %v273 = vsel %vm268, %v253, %v257
  %v274 = vsel %vm268, %v255, %v259
  %v275 = vsel %vm268, %v265, %v253
  %v276 = vsel %vm268, %v267, %v255
  %277 = vrot.lane.b32.xlu0 %v92, 111
  %v278 = vpop.permute.xlu0 %277
  %279 = vrot.lane.b32.xlu0 %v96, 111
  %v280 = vpop.permute.xlu0 %279
  %281 = vrot.lane.b32.xlu0 %v93, 111
  %v282 = vpop.permute.xlu0 %281
  %283 = vrot.lane.b32.xlu0 %v97, 111
  %v284 = vpop.permute.xlu0 %283
  %285 = vrot.lane.b32.xlu0 %v94, 111
  %v286 = vpop.permute.xlu0 %285
  %287 = vrot.lane.b32.xlu0 %v98, 111
  %v288 = vpop.permute.xlu0 %287
  %289 = vrot.lane.b32.xlu0 %v95, 111
  %v290 = vpop.permute.xlu0 %289
  %291 = vrot.lane.b32.xlu0 %v99, 111
  %v292 = vpop.permute.xlu0 %291
  %vm293 = vcmp.lt.s32.totalorder %v117, 111
  %v294 = vsel %vm293, %v286, %v290
  %v295 = vsel %vm293, %v288, %v292
  %v296 = vsel %vm293, %v282, %v286
  %v297 = vsel %vm293, %v284, %v288
  %v298 = vsel %vm293, %v278, %v282
  %v299 = vsel %vm293, %v280, %v284
  %v300 = vsel %vm293, %v290, %v278
  %v301 = vsel %vm293, %v292, %v280
  %v302 = vmul.f32 %v125, %v18
  %v303 = vmul.f32 %v123, %v19
  %v304 = vmul.f32 %v121, %v20
  %v305 = vmul.f32 %v119, %v21
  %v306 = vmul.f32 %v126, %v22
  %v307 = vmul.f32 %v124, %v23
  %v308 = vmul.f32 %v122, %v24
  %v309 = vmul.f32 %v120, %v25
  %v310 = vmul.f32 %v150, %v26
  %v311 = vmul.f32 %v148, %v27
  %v312 = vmul.f32 %v146, %v28
  %v313 = vmul.f32 %v144, %v29
  %v314 = vmul.f32 %v151, %v30
  %v315 = vmul.f32 %v149, %v31
  %v316 = vmul.f32 %v147, %v32
  %v317 = vmul.f32 %v145, %v33
  %v318 = vmul.f32 %v175, %v34
  %v319 = vmul.f32 %v173, %v35
  %v320 = vmul.f32 %v171, %v36
  %v321 = vmul.f32 %v169, %v37
  %v322 = vmul.f32 %v176, %v38
  %v323 = vmul.f32 %v174, %v39
  %v324 = vmul.f32 %v172, %v40
  %v325 = vmul.f32 %v170, %v41
  %v326 = vmul.f32 %v200, %v42
  %v327 = vmul.f32 %v198, %v43
  %v328 = vmul.f32 %v196, %v44
  %v329 = vmul.f32 %v194, %v45
  %v330 = vmul.f32 %v201, %v46
  %v331 = vmul.f32 %v199, %v47
  %v332 = vmul.f32 %v197, %v48
  %v333 = vmul.f32 %v195, %v49
  %v334 = vmul.f32 %v92, %v50
  %v335 = vmul.f32 %v93, %v51
  %v336 = vmul.f32 %v94, %v52
  %v337 = vmul.f32 %v95, %v53
  %v338 = vmul.f32 %v96, %v54
  %v339 = vmul.f32 %v97, %v55
  %v340 = vmul.f32 %v98, %v56
  %v341 = vmul.f32 %v99, %v57
  %v342 = vmul.f32 %v223, %v58
  %v343 = vmul.f32 %v221, %v59
  %v344 = vmul.f32 %v219, %v60
  %v345 = vmul.f32 %v225, %v61
  %v346 = vmul.f32 %v224, %v62
  %v347 = vmul.f32 %v222, %v63
  %v348 = vmul.f32 %v220, %v64
  %v349 = vmul.f32 %v226, %v65
  %v350 = vmul.f32 %v248, %v66
  %v351 = vmul.f32 %v246, %v67
  %v352 = vmul.f32 %v244, %v68
  %v353 = vmul.f32 %v250, %v69
  %v354 = vmul.f32 %v249, %v70
  %v355 = vmul.f32 %v247, %v71
  %v356 = vmul.f32 %v245, %v72
  %v357 = vmul.f32 %v251, %v73
  %v358 = vmul.f32 %v273, %v74
  %v359 = vmul.f32 %v271, %v75
  %v360 = vmul.f32 %v269, %v76
  %v361 = vmul.f32 %v275, %v77
  %v362 = vmul.f32 %v274, %v78
  %v363 = vmul.f32 %v272, %v79
  %v364 = vmul.f32 %v270, %v80
  %v365 = vmul.f32 %v276, %v81
  %v366 = vmul.f32 %v298, %v82
  %v367 = vmul.f32 %v296, %v83
  %v368 = vmul.f32 %v294, %v84
  %v369 = vmul.f32 %v300, %v85
  %v370 = vmul.f32 %v299, %v86
  %v371 = vmul.f32 %v297, %v87
  %v372 = vmul.f32 %v295, %v88
  %v373 = vmul.f32 %v301, %v89
  %v374 = vpack.c.bf16 %v306, %v302
  %v375 = vpack.c.bf16 %v307, %v303
  %v376 = vpack.c.bf16 %v308, %v304
  %v377 = vpack.c.bf16 %v309, %v305
  %v378 = vpack.c.bf16 %v314, %v310
  %v379 = vpack.c.bf16 %v315, %v311
  %v380 = vpack.c.bf16 %v316, %v312
  %v381 = vpack.c.bf16 %v317, %v313
  %v382 = vpack.c.bf16 %v322, %v318
  %v383 = vpack.c.bf16 %v323, %v319
  %v384 = vpack.c.bf16 %v324, %v320
  %v385 = vpack.c.bf16 %v325, %v321
  %v386 = vpack.c.bf16 %v330, %v326
  %v387 = vpack.c.bf16 %v331, %v327
  %v388 = vpack.c.bf16 %v332, %v328
  %v389 = vpack.c.bf16 %v333, %v329
  %v390 = vpack.c.bf16 %v338, %v334
  %v391 = vpack.c.bf16 %v339, %v335
  %v392 = vpack.c.bf16 %v340, %v336
  %v393 = vpack.c.bf16 %v341, %v337
  %v394 = vpack.c.bf16 %v346, %v342
  %v395 = vpack.c.bf16 %v347, %v343
  %v396 = vpack.c.bf16 %v348, %v344
  %v397 = vpack.c.bf16 %v349, %v345
  %v398 = vpack.c.bf16 %v354, %v350
  %v399 = vpack.c.bf16 %v355, %v351
  %v400 = vpack.c.bf16 %v356, %v352
  %v401 = vpack.c.bf16 %v357, %v353
  %v402 = vpack.c.bf16 %v362, %v358
  %v403 = vpack.c.bf16 %v363, %v359
  %v404 = vpack.c.bf16 %v364, %v360
  %v405 = vpack.c.bf16 %v365, %v361
  %v406 = vpack.c.bf16 %v370, %v366
  %v407 = vpack.c.bf16 %v371, %v367
  %v408 = vpack.c.bf16 %v372, %v368
  %v409 = vpack.c.bf16 %v373, %v369
  %v412 = vunpack.c.l.b16 %v90
  %v413 = vunpack.c.h.b16 %v90
  %v414 = vunpack.c.l.b16 %v91
  %v415 = vunpack.c.h.b16 %v91
  %v416 = vpack.c.b16 %v414, %v412
  %v417 = vpack.c.b16 %v415, %v413
  %vm419 = vcmask 130048
  %v421 = vsel %vm419, %v417, 0
  %423 = vmatpush.bf16.msra.mxu0 %v402
  %424 = vmatpush.bf16.msra.mxu0 %v398
  %425 = vmatpush.bf16.msra.mxu0 %v394
  %426 = vmatpush.bf16.msra.mxu0 %v390
  %427 = vmatpush.bf16.msra.mxu0 %v386
  %428 = vmatpush.bf16.msra.mxu0 %v382
  %429 = vmatpush.bf16.msra.mxu0 %v378
  %430 = vmatpush.bf16.msra.mxu0 %v374
  %431 = vmatmul.bf16.gmra.mxu0 %v416
  %v432 = vpop.f32.mrf.mxu0
  %v433 = vadd.f32 0.0, %v432
  %v434 = vpop.f32.mrf.mxu0
  %v435 = vadd.f32 0.0, %v434
  %436 = vdwg.mxu0
  %437 = vmatpush.bf16.msra.mxu0 0
  %438 = vmatpush.bf16.msra.mxu0 0
  %439 = vmatpush.bf16.msra.mxu0 0
  %440 = vmatpush.bf16.msra.mxu0 0
  %441 = vmatpush.bf16.msra.mxu0 0
  %442 = vmatpush.bf16.msra.mxu0 0
  %443 = vmatpush.bf16.msra.mxu0 0
  %444 = vmatpush.bf16.msra.mxu0 %v406
  %445 = vmatmul.bf16.gmra.mxu0 %v421
  %v446 = vpop.f32.mrf.mxu0
  %v447 = vadd.f32 %v433, %v446
  %v448 = vpop.f32.mrf.mxu0
  %v449 = vadd.f32 %v435, %v448
  %450 = vdwg.mxu0
  %451 = vmatpush.bf16.msra.mxu0 %v403
  %452 = vmatpush.bf16.msra.mxu0 %v399
  %453 = vmatpush.bf16.msra.mxu0 %v395
  %454 = vmatpush.bf16.msra.mxu0 %v391
  %455 = vmatpush.bf16.msra.mxu0 %v387
  %456 = vmatpush.bf16.msra.mxu0 %v383
  %457 = vmatpush.bf16.msra.mxu0 %v379
  %458 = vmatpush.bf16.msra.mxu0 %v375
  %459 = vmatmul.bf16.gmra.mxu0 %v416
  %v460 = vpop.f32.mrf.mxu0
  %v461 = vadd.f32 0.0, %v460
  %v462 = vpop.f32.mrf.mxu0
  %v463 = vadd.f32 0.0, %v462
  %464 = vdwg.mxu0
  %465 = vmatpush.bf16.msra.mxu0 0
  %466 = vmatpush.bf16.msra.mxu0 0
  %467 = vmatpush.bf16.msra.mxu0 0
  %468 = vmatpush.bf16.msra.mxu0 0
  %469 = vmatpush.bf16.msra.mxu0 0
  %470 = vmatpush.bf16.msra.mxu0 0
  %471 = vmatpush.bf16.msra.mxu0 0
  %472 = vmatpush.bf16.msra.mxu0 %v407
  %473 = vmatmul.bf16.gmra.mxu0 %v421
  %v474 = vpop.f32.mrf.mxu0
  %v475 = vadd.f32 %v461, %v474
  %v476 = vpop.f32.mrf.mxu0
  %v477 = vadd.f32 %v463, %v476
  %478 = vdwg.mxu0
  %479 = vmatpush.bf16.msra.mxu0 %v404
  %480 = vmatpush.bf16.msra.mxu0 %v400
  %481 = vmatpush.bf16.msra.mxu0 %v396
  %482 = vmatpush.bf16.msra.mxu0 %v392
  %483 = vmatpush.bf16.msra.mxu0 %v388
  %484 = vmatpush.bf16.msra.mxu0 %v384
  %485 = vmatpush.bf16.msra.mxu0 %v380
  %486 = vmatpush.bf16.msra.mxu0 %v376
  %487 = vmatmul.bf16.gmra.mxu0 %v416
  %v488 = vpop.f32.mrf.mxu0
  %v489 = vadd.f32 0.0, %v488
  %v490 = vpop.f32.mrf.mxu0
  %v491 = vadd.f32 0.0, %v490
  %492 = vdwg.mxu0
  %493 = vmatpush.bf16.msra.mxu0 0
  %494 = vmatpush.bf16.msra.mxu0 0
  %495 = vmatpush.bf16.msra.mxu0 0
  %496 = vmatpush.bf16.msra.mxu0 0
  %497 = vmatpush.bf16.msra.mxu0 0
  %498 = vmatpush.bf16.msra.mxu0 0
  %499 = vmatpush.bf16.msra.mxu0 0
  %500 = vmatpush.bf16.msra.mxu0 %v408
  %501 = vmatmul.bf16.gmra.mxu0 %v421
  %v502 = vpop.f32.mrf.mxu0
  %v503 = vadd.f32 %v489, %v502
  %v504 = vpop.f32.mrf.mxu0
  %v505 = vadd.f32 %v491, %v504
  %506 = vdwg.mxu0
  %507 = vmatpush.bf16.msra.mxu0 %v405
  %508 = vmatpush.bf16.msra.mxu0 %v401
  %509 = vmatpush.bf16.msra.mxu0 %v397
  %510 = vmatpush.bf16.msra.mxu0 %v393
  %511 = vmatpush.bf16.msra.mxu0 %v389
  %512 = vmatpush.bf16.msra.mxu0 %v385
  %513 = vmatpush.bf16.msra.mxu0 %v381
  %514 = vmatpush.bf16.msra.mxu0 %v377
  %515 = vmatmul.bf16.gmra.mxu0 %v416
  %v516 = vpop.f32.mrf.mxu0
  %v517 = vadd.f32 0.0, %v516
  %v518 = vpop.f32.mrf.mxu0
  %v519 = vadd.f32 0.0, %v518
  %520 = vdwg.mxu0
  %521 = vmatpush.bf16.msra.mxu0 0
  %522 = vmatpush.bf16.msra.mxu0 0
  %523 = vmatpush.bf16.msra.mxu0 0
  %524 = vmatpush.bf16.msra.mxu0 0
  %525 = vmatpush.bf16.msra.mxu0 0
  %526 = vmatpush.bf16.msra.mxu0 0
  %527 = vmatpush.bf16.msra.mxu0 0
  %528 = vmatpush.bf16.msra.mxu0 %v409
  %529 = vmatmul.bf16.gmra.mxu0 %v421
  %v530 = vpop.f32.mrf.mxu0
  %v531 = vadd.f32 %v517, %v530
  %v532 = vpop.f32.mrf.mxu0
  %v533 = vadd.f32 %v519, %v532
  %534 = vdwg.mxu0
  %v535 = vld [vmem:[%s3] sm:$0xff]
  %536 = vrot.lane.b32.xlu0 %v447, 17
  %v537 = vpop.permute.xlu0 %536
  %538 = vrot.lane.b32.xlu0 %v449, 17
  %v539 = vpop.permute.xlu0 %538
  %540 = vrot.lane.b32.xlu0 %v475, 17
  %v541 = vpop.permute.xlu0 %540
  %542 = vrot.lane.b32.xlu0 %v477, 17
  %v543 = vpop.permute.xlu0 %542
  %544 = vrot.lane.b32.xlu0 %v503, 17
  %v545 = vpop.permute.xlu0 %544
  %546 = vrot.lane.b32.xlu0 %v505, 17
  %v547 = vpop.permute.xlu0 %546
  %548 = vrot.lane.b32.xlu0 %v531, 17
  %v549 = vpop.permute.xlu0 %548
  %550 = vrot.lane.b32.xlu0 %v533, 17
  %v551 = vpop.permute.xlu0 %550
  %v552 = vsel %vm118, %v545, %v549
  %v553 = vsel %vm118, %v547, %v551
  %v554 = vsel %vm118, %v541, %v545
  %v555 = vsel %vm118, %v543, %v547
  %v556 = vsel %vm118, %v537, %v541
  %v557 = vsel %vm118, %v539, %v543
  %v558 = vsel %vm118, %v549, %v537
  %v559 = vsel %vm118, %v551, %v539
  %560 = vrot.lane.b32.xlu0 %v447, 16
  %v561 = vpop.permute.xlu0 %560
  %562 = vrot.lane.b32.xlu0 %v449, 16
  %v563 = vpop.permute.xlu0 %562
  %564 = vrot.lane.b32.xlu0 %v475, 16
  %v565 = vpop.permute.xlu0 %564
  %566 = vrot.lane.b32.xlu0 %v477, 16
  %v567 = vpop.permute.xlu0 %566
  %568 = vrot.lane.b32.xlu0 %v503, 16
  %v569 = vpop.permute.xlu0 %568
  %570 = vrot.lane.b32.xlu0 %v505, 16
  %v571 = vpop.permute.xlu0 %570
  %572 = vrot.lane.b32.xlu0 %v531, 16
  %v573 = vpop.permute.xlu0 %572
  %574 = vrot.lane.b32.xlu0 %v533, 16
  %v575 = vpop.permute.xlu0 %574
  %v576 = vsel %vm143, %v569, %v573
  %v577 = vsel %vm143, %v571, %v575
  %v578 = vsel %vm143, %v565, %v569
  %v579 = vsel %vm143, %v567, %v571
  %v580 = vsel %vm143, %v561, %v565
  %v581 = vsel %vm143, %v563, %v567
  %v582 = vsel %vm143, %v573, %v561
  %v583 = vsel %vm143, %v575, %v563
  %584 = vrot.lane.b32.xlu0 %v447, 15
  %v585 = vpop.permute.xlu0 %584
  %586 = vrot.lane.b32.xlu0 %v449, 15
  %v587 = vpop.permute.xlu0 %586
  %588 = vrot.lane.b32.xlu0 %v475, 15
  %v589 = vpop.permute.xlu0 %588
  %590 = vrot.lane.b32.xlu0 %v477, 15
  %v591 = vpop.permute.xlu0 %590
  %592 = vrot.lane.b32.xlu0 %v503, 15
  %v593 = vpop.permute.xlu0 %592
  %594 = vrot.lane.b32.xlu0 %v505, 15
  %v595 = vpop.permute.xlu0 %594
  %596 = vrot.lane.b32.xlu0 %v531, 15
  %v597 = vpop.permute.xlu0 %596
  %598 = vrot.lane.b32.xlu0 %v533, 15
  %v599 = vpop.permute.xlu0 %598
  %v600 = vsel %vm168, %v593, %v597
  %v601 = vsel %vm168, %v595, %v599
  %v602 = vsel %vm168, %v589, %v593
  %v603 = vsel %vm168, %v591, %v595
  %v604 = vsel %vm168, %v585, %v589
  %v605 = vsel %vm168, %v587, %v591
  %v606 = vsel %vm168, %v597, %v585
  %v607 = vsel %vm168, %v599, %v587
  %608 = vrot.lane.b32.xlu0 %v447, 1
  %v609 = vpop.permute.xlu0 %608
  %610 = vrot.lane.b32.xlu0 %v449, 1
  %v611 = vpop.permute.xlu0 %610
  %612 = vrot.lane.b32.xlu0 %v475, 1
  %v613 = vpop.permute.xlu0 %612
  %614 = vrot.lane.b32.xlu0 %v477, 1
  %v615 = vpop.permute.xlu0 %614
  %616 = vrot.lane.b32.xlu0 %v503, 1
  %v617 = vpop.permute.xlu0 %616
  %618 = vrot.lane.b32.xlu0 %v505, 1
  %v619 = vpop.permute.xlu0 %618
  %620 = vrot.lane.b32.xlu0 %v531, 1
  %v621 = vpop.permute.xlu0 %620
  %622 = vrot.lane.b32.xlu0 %v533, 1
  %v623 = vpop.permute.xlu0 %622
  %v624 = vsel %vm193, %v617, %v621
  %v625 = vsel %vm193, %v619, %v623
  %v626 = vsel %vm193, %v613, %v617
  %v627 = vsel %vm193, %v615, %v619
  %v628 = vsel %vm193, %v609, %v613
  %v629 = vsel %vm193, %v611, %v615
  %v630 = vsel %vm193, %v621, %v609
  %v631 = vsel %vm193, %v623, %v611
  %632 = vrot.lane.b32.xlu0 %v447, 127
  %v633 = vpop.permute.xlu0 %632
  %634 = vrot.lane.b32.xlu0 %v449, 127
  %v635 = vpop.permute.xlu0 %634
  %636 = vrot.lane.b32.xlu0 %v475, 127
  %v637 = vpop.permute.xlu0 %636
  %638 = vrot.lane.b32.xlu0 %v477, 127
  %v639 = vpop.permute.xlu0 %638
  %640 = vrot.lane.b32.xlu0 %v503, 127
  %v641 = vpop.permute.xlu0 %640
  %642 = vrot.lane.b32.xlu0 %v505, 127
  %v643 = vpop.permute.xlu0 %642
  %644 = vrot.lane.b32.xlu0 %v531, 127
  %v645 = vpop.permute.xlu0 %644
  %646 = vrot.lane.b32.xlu0 %v533, 127
  %v647 = vpop.permute.xlu0 %646
  %v648 = vsel %vm218, %v641, %v645
  %v649 = vsel %vm218, %v643, %v647
  %v650 = vsel %vm218, %v637, %v641
  %v651 = vsel %vm218, %v639, %v643
  %v652 = vsel %vm218, %v633, %v637
  %v653 = vsel %vm218, %v635, %v639
  %v654 = vsel %vm218, %v645, %v633
  %v655 = vsel %vm218, %v647, %v635
  %656 = vrot.lane.b32.xlu0 %v447, 113
  %v657 = vpop.permute.xlu0 %656
  %658 = vrot.lane.b32.xlu0 %v449, 113
  %v659 = vpop.permute.xlu0 %658
  %660 = vrot.lane.b32.xlu0 %v475, 113
  %v661 = vpop.permute.xlu0 %660
  %662 = vrot.lane.b32.xlu0 %v477, 113
  %v663 = vpop.permute.xlu0 %662
  %664 = vrot.lane.b32.xlu0 %v503, 113
  %v665 = vpop.permute.xlu0 %664
  %666 = vrot.lane.b32.xlu0 %v505, 113
  %v667 = vpop.permute.xlu0 %666
  %668 = vrot.lane.b32.xlu0 %v531, 113
  %v669 = vpop.permute.xlu0 %668
  %670 = vrot.lane.b32.xlu0 %v533, 113
  %v671 = vpop.permute.xlu0 %670
  %v672 = vsel %vm243, %v665, %v669
  %v673 = vsel %vm243, %v667, %v671
  %v674 = vsel %vm243, %v661, %v665
  %v675 = vsel %vm243, %v663, %v667
  %v676 = vsel %vm243, %v657, %v661
  %v677 = vsel %vm243, %v659, %v663
  %v678 = vsel %vm243, %v669, %v657
  %v679 = vsel %vm243, %v671, %v659
  %680 = vrot.lane.b32.xlu0 %v447, 112
  %v681 = vpop.permute.xlu0 %680
  %682 = vrot.lane.b32.xlu0 %v449, 112
  %v683 = vpop.permute.xlu0 %682
  %684 = vrot.lane.b32.xlu0 %v475, 112
  %v685 = vpop.permute.xlu0 %684
  %686 = vrot.lane.b32.xlu0 %v477, 112
  %v687 = vpop.permute.xlu0 %686
  %688 = vrot.lane.b32.xlu0 %v503, 112
  %v689 = vpop.permute.xlu0 %688
  %690 = vrot.lane.b32.xlu0 %v505, 112
  %v691 = vpop.permute.xlu0 %690
  %692 = vrot.lane.b32.xlu0 %v531, 112
  %v693 = vpop.permute.xlu0 %692
  %694 = vrot.lane.b32.xlu0 %v533, 112
  %v695 = vpop.permute.xlu0 %694
  %v696 = vsel %vm268, %v689, %v693
  %v697 = vsel %vm268, %v691, %v695
  %v698 = vsel %vm268, %v685, %v689
  %v699 = vsel %vm268, %v687, %v691
  %v700 = vsel %vm268, %v681, %v685
  %v701 = vsel %vm268, %v683, %v687
  %v702 = vsel %vm268, %v693, %v681
  %v703 = vsel %vm268, %v695, %v683
  %704 = vrot.lane.b32.xlu0 %v447, 111
  %v705 = vpop.permute.xlu0 %704
  %706 = vrot.lane.b32.xlu0 %v449, 111
  %v707 = vpop.permute.xlu0 %706
  %708 = vrot.lane.b32.xlu0 %v475, 111
  %v709 = vpop.permute.xlu0 %708
  %710 = vrot.lane.b32.xlu0 %v477, 111
  %v711 = vpop.permute.xlu0 %710
  %712 = vrot.lane.b32.xlu0 %v503, 111
  %v713 = vpop.permute.xlu0 %712
  %714 = vrot.lane.b32.xlu0 %v505, 111
  %v715 = vpop.permute.xlu0 %714
  %716 = vrot.lane.b32.xlu0 %v531, 111
  %v717 = vpop.permute.xlu0 %716
  %718 = vrot.lane.b32.xlu0 %v533, 111
  %v719 = vpop.permute.xlu0 %718
  %v720 = vsel %vm293, %v713, %v717
  %v721 = vsel %vm293, %v715, %v719
  %v722 = vsel %vm293, %v709, %v713
  %v723 = vsel %vm293, %v711, %v715
  %v724 = vsel %vm293, %v705, %v709
  %v725 = vsel %vm293, %v707, %v711
  %v726 = vsel %vm293, %v717, %v705
  %v727 = vsel %vm293, %v719, %v707
  %v728 = vmul.f32 %v558, %v18
  %v729 = vmul.f32 %v556, %v19
  %v730 = vmul.f32 %v554, %v20
  %v731 = vmul.f32 %v552, %v21
  %v732 = vmul.f32 %v559, %v22
  %v733 = vmul.f32 %v557, %v23
  %v734 = vmul.f32 %v555, %v24
  %v735 = vmul.f32 %v553, %v25
  %v736 = vmul.f32 %v582, %v26
  %v737 = vmul.f32 %v580, %v27
  %v738 = vmul.f32 %v578, %v28
  %v739 = vmul.f32 %v576, %v29
  %v740 = vmul.f32 %v583, %v30
  %v741 = vmul.f32 %v581, %v31
  %v742 = vmul.f32 %v579, %v32
  %v743 = vmul.f32 %v577, %v33
  %v744 = vmul.f32 %v606, %v34
  %v745 = vmul.f32 %v604, %v35
  %v746 = vmul.f32 %v602, %v36
  %v747 = vmul.f32 %v600, %v37
  %v748 = vmul.f32 %v607, %v38
  %v749 = vmul.f32 %v605, %v39
  %v750 = vmul.f32 %v603, %v40
  %v751 = vmul.f32 %v601, %v41
  %v752 = vmul.f32 %v630, %v42
  %v753 = vmul.f32 %v628, %v43
  %v754 = vmul.f32 %v626, %v44
  %v755 = vmul.f32 %v624, %v45
  %v756 = vmul.f32 %v631, %v46
  %v757 = vmul.f32 %v629, %v47
  %v758 = vmul.f32 %v627, %v48
  %v759 = vmul.f32 %v625, %v49
  %v760 = vmul.f32 %v447, %v50
  %v761 = vmul.f32 %v475, %v51
  %v762 = vmul.f32 %v503, %v52
  %v763 = vmul.f32 %v531, %v53
  %v764 = vmul.f32 %v449, %v54
  %v765 = vmul.f32 %v477, %v55
  %v766 = vmul.f32 %v505, %v56
  %v767 = vmul.f32 %v533, %v57
  %v768 = vmul.f32 %v652, %v58
  %v769 = vmul.f32 %v650, %v59
  %v770 = vmul.f32 %v648, %v60
  %v771 = vmul.f32 %v654, %v61
  %v772 = vmul.f32 %v653, %v62
  %v773 = vmul.f32 %v651, %v63
  %v774 = vmul.f32 %v649, %v64
  %v775 = vmul.f32 %v655, %v65
  %v776 = vmul.f32 %v676, %v66
  %v777 = vmul.f32 %v674, %v67
  %v778 = vmul.f32 %v672, %v68
  %v779 = vmul.f32 %v678, %v69
  %v780 = vmul.f32 %v677, %v70
  %v781 = vmul.f32 %v675, %v71
  %v782 = vmul.f32 %v673, %v72
  %v783 = vmul.f32 %v679, %v73
  %v784 = vmul.f32 %v700, %v74
  %v785 = vmul.f32 %v698, %v75
  %v786 = vmul.f32 %v696, %v76
  %v787 = vmul.f32 %v702, %v77
  %v788 = vmul.f32 %v701, %v78
  %v789 = vmul.f32 %v699, %v79
  %v790 = vmul.f32 %v697, %v80
  %v791 = vmul.f32 %v703, %v81
  %v792 = vmul.f32 %v724, %v82
  %v793 = vmul.f32 %v722, %v83
  %v794 = vmul.f32 %v720, %v84
  %v795 = vmul.f32 %v726, %v85
  %v796 = vmul.f32 %v725, %v86
  %v797 = vmul.f32 %v723, %v87
  %v798 = vmul.f32 %v721, %v88
  %v799 = vmul.f32 %v727, %v89
  %v800 = vpack.c.bf16 %v732, %v728
  %v801 = vpack.c.bf16 %v733, %v729
  %v802 = vpack.c.bf16 %v734, %v730
  %v803 = vpack.c.bf16 %v735, %v731
  %v804 = vpack.c.bf16 %v740, %v736
  %v805 = vpack.c.bf16 %v741, %v737
  %v806 = vpack.c.bf16 %v742, %v738
  %v807 = vpack.c.bf16 %v743, %v739
  %v808 = vpack.c.bf16 %v748, %v744
  %v809 = vpack.c.bf16 %v749, %v745
  %v810 = vpack.c.bf16 %v750, %v746
  %v811 = vpack.c.bf16 %v751, %v747
  %v812 = vpack.c.bf16 %v756, %v752
  %v813 = vpack.c.bf16 %v757, %v753
  %v814 = vpack.c.bf16 %v758, %v754
  %v815 = vpack.c.bf16 %v759, %v755
  %v816 = vpack.c.bf16 %v764, %v760
  %v817 = vpack.c.bf16 %v765, %v761
  %v818 = vpack.c.bf16 %v766, %v762
  %v819 = vpack.c.bf16 %v767, %v763
  %v820 = vpack.c.bf16 %v772, %v768
  %v821 = vpack.c.bf16 %v773, %v769
  %v822 = vpack.c.bf16 %v774, %v770
  %v823 = vpack.c.bf16 %v775, %v771
  %v824 = vpack.c.bf16 %v780, %v776
  %v825 = vpack.c.bf16 %v781, %v777
  %v826 = vpack.c.bf16 %v782, %v778
  %v827 = vpack.c.bf16 %v783, %v779
  %v828 = vpack.c.bf16 %v788, %v784
  %v829 = vpack.c.bf16 %v789, %v785
  %v830 = vpack.c.bf16 %v790, %v786
  %v831 = vpack.c.bf16 %v791, %v787
  %v832 = vpack.c.bf16 %v796, %v792
  %v833 = vpack.c.bf16 %v797, %v793
  %v834 = vpack.c.bf16 %v798, %v794
  %v835 = vpack.c.bf16 %v799, %v795
  %v837 = vunpack.c.l.b16 %v535
  %v838 = vunpack.c.h.b16 %v535
  %v839 = vpack.c.b16 %v837, %v837
  %v840 = vpack.c.b16 %v838, %v838
  %v843 = vsel %vm419, %v840, 0
  %845 = vmatpush.bf16.msra.mxu0 %v828
  %846 = vmatpush.bf16.msra.mxu0 %v824
  %847 = vmatpush.bf16.msra.mxu0 %v820
  %848 = vmatpush.bf16.msra.mxu0 %v816
  %849 = vmatpush.bf16.msra.mxu0 %v812
  %850 = vmatpush.bf16.msra.mxu0 %v808
  %851 = vmatpush.bf16.msra.mxu0 %v804
  %852 = vmatpush.bf16.msra.mxu0 %v800
  %853 = vmatmul.bf16.gmra.mxu0 %v839
  %v854 = vpop.f32.mrf.mxu0
  %v855 = vadd.f32 0.0, %v854
  %v856 = vpop.f32.mrf.mxu0
  %857 = vdwg.mxu0
  %858 = vmatpush.bf16.msra.mxu0 0
  %859 = vmatpush.bf16.msra.mxu0 0
  %860 = vmatpush.bf16.msra.mxu0 0
  %861 = vmatpush.bf16.msra.mxu0 0
  %862 = vmatpush.bf16.msra.mxu0 0
  %863 = vmatpush.bf16.msra.mxu0 0
  %864 = vmatpush.bf16.msra.mxu0 0
  %865 = vmatpush.bf16.msra.mxu0 %v832
  %866 = vmatmul.bf16.gmra.mxu0 %v843
  %v867 = vpop.f32.mrf.mxu0
  %v868 = vadd.f32 %v855, %v867
  %v869 = vpop.f32.mrf.mxu0
  %870 = vdwg.mxu0
  %871 = vmatpush.bf16.msra.mxu0 %v829
  %872 = vmatpush.bf16.msra.mxu0 %v825
  %873 = vmatpush.bf16.msra.mxu0 %v821
  %874 = vmatpush.bf16.msra.mxu0 %v817
  %875 = vmatpush.bf16.msra.mxu0 %v813
  %876 = vmatpush.bf16.msra.mxu0 %v809
  %877 = vmatpush.bf16.msra.mxu0 %v805
  %878 = vmatpush.bf16.msra.mxu0 %v801
  %879 = vmatmul.bf16.gmra.mxu0 %v839
  %v880 = vpop.f32.mrf.mxu0
  %v881 = vadd.f32 0.0, %v880
  %v882 = vpop.f32.mrf.mxu0
  %883 = vdwg.mxu0
  %884 = vmatpush.bf16.msra.mxu0 0
  %885 = vmatpush.bf16.msra.mxu0 0
  %886 = vmatpush.bf16.msra.mxu0 0
  %887 = vmatpush.bf16.msra.mxu0 0
  %888 = vmatpush.bf16.msra.mxu0 0
  %889 = vmatpush.bf16.msra.mxu0 0
  %890 = vmatpush.bf16.msra.mxu0 0
  %891 = vmatpush.bf16.msra.mxu0 %v833
  %892 = vmatmul.bf16.gmra.mxu0 %v843
  %v893 = vpop.f32.mrf.mxu0
  %v894 = vadd.f32 %v881, %v893
  %v895 = vpop.f32.mrf.mxu0
  %896 = vdwg.mxu0
  %897 = vmatpush.bf16.msra.mxu0 %v830
  %898 = vmatpush.bf16.msra.mxu0 %v826
  %899 = vmatpush.bf16.msra.mxu0 %v822
  %900 = vmatpush.bf16.msra.mxu0 %v818
  %901 = vmatpush.bf16.msra.mxu0 %v814
  %902 = vmatpush.bf16.msra.mxu0 %v810
  %903 = vmatpush.bf16.msra.mxu0 %v806
  %904 = vmatpush.bf16.msra.mxu0 %v802
  %905 = vmatmul.bf16.gmra.mxu0 %v839
  %v906 = vpop.f32.mrf.mxu0
  %v907 = vadd.f32 0.0, %v906
  %v908 = vpop.f32.mrf.mxu0
  %909 = vdwg.mxu0
  %910 = vmatpush.bf16.msra.mxu0 0
  %911 = vmatpush.bf16.msra.mxu0 0
  %912 = vmatpush.bf16.msra.mxu0 0
  %913 = vmatpush.bf16.msra.mxu0 0
  %914 = vmatpush.bf16.msra.mxu0 0
  %915 = vmatpush.bf16.msra.mxu0 0
  %916 = vmatpush.bf16.msra.mxu0 0
  %917 = vmatpush.bf16.msra.mxu0 %v834
  %918 = vmatmul.bf16.gmra.mxu0 %v843
  %v919 = vpop.f32.mrf.mxu0
  %v920 = vadd.f32 %v907, %v919
  %v921 = vpop.f32.mrf.mxu0
  %922 = vdwg.mxu0
  %923 = vmatpush.bf16.msra.mxu0 %v831
  %924 = vmatpush.bf16.msra.mxu0 %v827
  %925 = vmatpush.bf16.msra.mxu0 %v823
  %926 = vmatpush.bf16.msra.mxu0 %v819
  %927 = vmatpush.bf16.msra.mxu0 %v815
  %928 = vmatpush.bf16.msra.mxu0 %v811
  %929 = vmatpush.bf16.msra.mxu0 %v807
  %930 = vmatpush.bf16.msra.mxu0 %v803
  %931 = vmatmul.bf16.gmra.mxu0 %v839
  %v932 = vpop.f32.mrf.mxu0
  %v933 = vadd.f32 0.0, %v932
  %v934 = vpop.f32.mrf.mxu0
  %935 = vdwg.mxu0
  %936 = vmatpush.bf16.msra.mxu0 0
  %937 = vmatpush.bf16.msra.mxu0 0
  %938 = vmatpush.bf16.msra.mxu0 0
  %939 = vmatpush.bf16.msra.mxu0 0
  %940 = vmatpush.bf16.msra.mxu0 0
  %941 = vmatpush.bf16.msra.mxu0 0
  %942 = vmatpush.bf16.msra.mxu0 0
  %943 = vmatpush.bf16.msra.mxu0 %v835
  %944 = vmatmul.bf16.gmra.mxu0 %v843
  %v945 = vpop.f32.mrf.mxu0
  %v946 = vadd.f32 %v933, %v945
  %v947 = vpop.f32.mrf.mxu0
  %948 = vdwg.mxu0
  %949 = vst [vmem:[%s4] sm:$0xff] %v868
  %950 = vst [vmem:[%s4 + $0x8] sm:$0xff] %v894
  %951 = vst [vmem:[%s4 + $0x10] sm:$0xff] %v920
  %952 = vst [vmem:[%s4 + $0x18] sm:$0xff] %v946
  // Predicated region
  $region18: #{network_forward.1} parent=0 // pred_check
    _
  $region19: #{network_forward.1} parent=0 // pred_check_branch
    %954 = sbr.rel (0) target = $region21
  $region20: #{network_forward.1} parent=0 // pred_region
    _
  $region21: #{network_forward.1} parent=0 // pred_fallthru
    _
  // Predicated region
  $region22: #{network_forward.1} parent=0 // pred_check
    _
  $region23: #{network_forward.1} parent=0 // pred_check_branch
    %956 = sbr.rel (0) target = $region25
  $region24: #{network_forward.1} parent=0 // pred_region
    _
  $region25: #{network_forward.1} parent=0 // pred_fallthru
    _

</llo_original>
